<compile_context>
chip_gen: v5e
topology: v5e:2x2
jax: 0.10.0
libtpu: 0.0.40
codegen_flags: <defaults>
</compile_context>

<pallas_src>
import math
import functools

import jax
import jax.numpy as jnp
from jax.experimental import pallas as pl
from jax.experimental.pallas import tpu as pltpu


# --------------------------------------------------------------------------------------
# Kernel
# --------------------------------------------------------------------------------------
def _graph_perceptron_kernel(h_ref, s_ref, x_ref, y_ref, acc_ref, *, K, matmul_dtype):
    """One batch tile of the polynomial graph filter + ReLU.

    h_ref:   SMEM [K]      scalar filter taps (scalar-prefetched)
    s_ref:   VMEM [N, N]   graph shift operator (whole array, single resident buffer)
    x_ref:   VMEM [TB, N]  input signal tile (matmul_dtype)
    y_ref:   VMEM [TB, N]  output tile
    acc_ref: VMEM [TB, N]  f32 accumulator scratch (keeps vreg pressure low at big TB)
    """
    # Hoist the K SMEM scalar reads out of the shift loop.
    taps = [h_ref[k] for k in range(K)]

    x0 = x_ref[...]  # already matmul_dtype (cast once in the wrapper)

    # k = 0 term; (re)initialize the accumulator for this batch tile.
    acc_ref[...] = taps[0] * x0.astype(jnp.float32)

    if K > 1:
        S = s_ref[...]  # resident, matmul_dtype
        xk = x0.astype(matmul_dtype)
        # k = 1 .. K-1 : repeated graph shifts on the MXU, f32 accumulation.
        for k in range(1, K):
            zk = jnp.dot(xk, S, preferred_element_type=jnp.float32)
            acc_ref[...] += taps[k] * zk
            if k + 1 < K:
                xk = zk.astype(matmul_dtype)

    # sigma = ReLU
    y_ref[...] = jnp.maximum(acc_ref[...], 0.0).astype(y_ref.dtype)


# --------------------------------------------------------------------------------------
# Tiling / hardware helpers
# --------------------------------------------------------------------------------------
def _round_up(v, m):
    return (v + m - 1) // m * m


def _default_tile_cap():
    """Batch-tile cap matched to the MXU width (128 rows on v5e, 256 on v6e/v7x)."""
    try:
        kind = jax.devices()[0].device_kind.lower()
    except Exception:
        return 128
    if "v5 lite" in kind or "v5lite" in kind or "v5e" in kind:
        return 128
    return 256


def _choose_batch_tile(B, cap):
    """Multiple-of-8 batch tile; keep >= 2 grid steps when B >= 16 (v7x core split)."""
    if B <= 8:
        return B  # tiny batch: one block equal to the full dim (allowed by Pallas)
    tb = min(cap, _round_up(B // 2, 8))
    return max(8, min(tb, _round_up(B, 8)))


def _vmem_capacity_bytes():
    try:
        return int(pltpu.get_tpu_info().vmem_capacity_bytes)
    except Exception:
        return 64 << 20  # safe lower bound across v5e/v6e/v7x


# --------------------------------------------------------------------------------------
# pallas_call wrapper (polynomial path)
# --------------------------------------------------------------------------------------
def _graph_perceptron_pallas(x, gso, weight, *, tile_cap, matmul_dtype, out_dtype):
    B, N = x.shape
    assert gso.shape == (N, N)
    K = int(weight.shape[0])

    weight = weight.astype(jnp.float32)
    # Cast the MXU operands once in the wrapper (halves S's VMEM footprint and the
    # per-tile x DMA on the bf16 path).  Accumulation stays f32 inside the kernel.
    if gso.dtype != matmul_dtype:
        gso = gso.astype(matmul_dtype)
    if x.dtype != matmul_dtype:
        x = x.astype(matmul_dtype)

    if tile_cap is None:
        tile_cap = _default_tile_cap()
    tb = _choose_batch_tile(B, tile_cap)
    grid = (pl.cdiv(B, tb),)

    mm_isize = jnp.dtype(matmul_dtype).itemsize
    out_isize = jnp.dtype(out_dtype).itemsize

    # VMEM budget: 1x resident S (single-buffered), double-buffered x/y tiles,
    # f32 accumulator scratch, plus headroom; clamped to the generation's capacity.
    s_bytes = N * N * mm_isize
    io_bytes = 2 * tb * N * (mm_isize + out_isize)
    acc_bytes = tb * N * 4
    needed = s_bytes + io_bytes + acc_bytes + (2 << 20)
    vmem_limit = int(min(max(needed, 16 << 20), _vmem_capacity_bytes() - (4 << 20)))

    cost = pl.CostEstimate(
        flops=2 * B * N * N * (K - 1) + 2 * K * B * N,
        bytes_accessed=s_bytes + B * N * (mm_isize + out_isize) + K * 4,
        transcendentals=0,
    )

    kernel = functools.partial(_graph_perceptron_kernel, K=K, matmul_dtype=matmul_dtype)

    grid_spec = pltpu.PrefetchScalarGridSpec(
        num_scalar_prefetch=1,  # weight -> SMEM, passed to kernel + index_maps
        grid=grid,
        in_specs=[
            # S: whole array placed in VMEM once -> single resident buffer (no
            # pipeline double-buffering of a revisit-constant operand).
            pl.BlockSpec(memory_space=pltpu.MemorySpace.VMEM),
            # x: one lane-dense [TB, N] batch tile per grid step.
            pl.BlockSpec((tb, N), lambda i, h: (i, 0)),
        ],
        out_specs=pl.BlockSpec((tb, N), lambda i, h: (i, 0)),
        scratch_shapes=[pltpu.VMEM((tb, N), jnp.float32)],  # f32 accumulator
    )

    return pl.pallas_call(
        kernel,
        out_shape=jax.ShapeDtypeStruct((B, N), out_dtype),
        grid_spec=grid_spec,
        compiler_params=pltpu.CompilerParams(
            dimension_semantics=("parallel",),  # batch tiles split across TCs on v7x
            vmem_limit_bytes=vmem_limit,
        ),
        cost_estimate=cost,
    )(weight, gso, x)


# --------------------------------------------------------------------------------------
# Public entry point (adds the B >> N algebraic fast path)
# --------------------------------------------------------------------------------------
def graph_perceptron(x, gso, weight, *, tile_cap=None, matmul_dtype=jnp.bfloat16,
                     out_dtype=jnp.float32, allow_precompute=True):
    """Pallas implementation of GraphPerceptron.forward (sigma = ReLU).

    matmul_dtype: dtype of the MXU operands (S, x, z_k).  bf16 by default (MXU-native
                  on v5e/v6e/v7x); pass jnp.float32 for strict-tolerance callers.
    """
    B, N = x.shape
    K = int(weight.shape[0])
    weight = weight.astype(jnp.float32)

    # Fast path when B > N (and K >= 3): precompute H = sum_{k>=1} h[k] S^k once in f32
    # (K-2 extra NxNxN matmuls), then a single Pallas relu(h0*x + x @ H) batch matmul.
    if allow_precompute and K >= 3 and B > N:
        S32 = gso.astype(jnp.float32)
        Pk = S32
        Hp = weight[1] * Pk
        for k in range(2, K):
            Pk = Pk @ S32
            Hp = Hp + weight[k] * Pk
        weight_eff = jnp.concatenate([weight[:1], jnp.ones((1,), jnp.float32)])
        return _graph_perceptron_pallas(x, Hp, weight_eff, tile_cap=tile_cap,
                                        matmul_dtype=matmul_dtype, out_dtype=out_dtype)

    return _graph_perceptron_pallas(x, gso, weight, tile_cap=tile_cap,
                                    matmul_dtype=matmul_dtype, out_dtype=out_dtype)


# --------------------------------------------------------------------------------------
# Pure-JAX reference (mirrors the PyTorch FilterFunction + ReLU)
# --------------------------------------------------------------------------------------
def _reference(x, gso, weight):
    K = weight.shape[0]
    zk = x
    acc = weight[0] * x
    for k in range(1, K):
        zk = zk @ gso
        acc = acc + weight[k] * zk
    return jnp.maximum(acc, 0.0)


if __name__ == "__main__":
    key = jax.random.PRNGKey(0)

    # ---------------- Test 1 & 2: polynomial path (B < N) ----------------
    B, N, K = 32, 128, 3
    k_x, k_s, k_w, key = jax.random.split(key, 4)

    x = jax.random.normal(k_x, (B, N), dtype=jnp.float32)
    S = jax.random.uniform(k_s, (N, N), dtype=jnp.float32)
    S = S / jnp.sum(S, axis=1, keepdims=True)  # row-normalized GSO

    stdv = 1.0 / math.sqrt(K)  # mirrors reset_parameters()
    weight = jax.random.uniform(k_w, (K,), dtype=jnp.float32, minval=-stdv, maxval=stdv)

    y_ref = _reference(x, S, weight)

    # f32 MXU path: strict tolerance.
    y_f32 = jax.block_until_ready(graph_perceptron(x, S, weight, matmul_dtype=jnp.float32))
    assert y_f32.shape == (B, N)
    assert jnp.allclose(y_f32, y_ref, atol=1e-4, rtol=1e-4)

    # default bf16 MXU path: f32 accumulation, looser tolerance (bf16 operand rounding).
    y_bf16 = jax.block_until_ready(graph_perceptron(x, S, weight))
    assert y_bf16.shape == (B, N)
    assert jnp.allclose(y_bf16, y_ref, atol=5e-2, rtol=5e-2)

    # ---------------- Test 3: B > N triggers the H-precompute fast path ----------------
    B2, N2, K2 = 256, 128, 4
    k_x2, k_s2, k_w2, key = jax.random.split(key, 4)
    x2 = jax.random.normal(k_x2, (B2, N2), dtype=jnp.float32)
    S2 = jax.random.uniform(k_s2, (N2, N2), dtype=jnp.float32)
    S2 = S2 / jnp.sum(S2, axis=1, keepdims=True)
    stdv2 = 1.0 / math.sqrt(K2)
    w2 = jax.random.uniform(k_w2, (K2,), dtype=jnp.float32, minval=-stdv2, maxval=stdv2)

    y2 = jax.block_until_ready(graph_perceptron(x2, S2, w2, matmul_dtype=jnp.float32))
    y2_ref = _reference(x2, S2, w2)
    assert y2.shape == (B2, N2)
    assert jnp.allclose(y2, y2_ref, atol=1e-4, rtol=1e-4)

    print("KERNEL_OK")
</pallas_src>

<mosaic_0001>
module attributes {stable_mosaic.version = 11 : i64} {
  func.func @_graph_perceptron_kernel(%arg0: i32, %arg1: memref<3xf32, #tpu.memory_space<smem>>, %arg2: memref<128x128xf32, #tpu.memory_space<vmem>>, %arg3: memref<16x128xf32, #tpu.memory_space<vmem>>, %arg4: memref<16x128xf32, #tpu.memory_space<vmem>>, %arg5: memref<16x128xf32, #tpu.memory_space<vmem>>) attributes {dimension_semantics = [#tpu.dimension_semantics<parallel>], iteration_bounds = array<i64: 2>, scalar_prefetch = 1 : i64, scratch_operands = 1 : i64, tpu.core_type = #tpu.core_type<tc>, window_params = [{pipeline_mode = #tpu.pipeline_mode<synchronous>, transform_indices = @transform_0, window_bounds = array<i64: 128, 128>}, {transform_indices = @transform_1, window_bounds = array<i64: 16, 128>}, {transform_indices = @transform_2, window_bounds = array<i64: 16, 128>}]} {
    %c0 = arith.constant 0 : index
    %0 = memref.load %arg1[%c0] : memref<3xf32, #tpu.memory_space<smem>>
    %c1 = arith.constant 1 : index
    %1 = memref.load %arg1[%c1] : memref<3xf32, #tpu.memory_space<smem>>
    %c2 = arith.constant 2 : index
    %2 = memref.load %arg1[%c2] : memref<3xf32, #tpu.memory_space<smem>>
    %c0_0 = arith.constant 0 : index
    %c0_1 = arith.constant 0 : index
    %3 = vector.load %arg3[%c0_0, %c0_1] : memref<16x128xf32, #tpu.memory_space<vmem>>, vector<16x128xf32>
    %4 = vector.broadcast %0 : f32 to vector<16x128xf32>
    %5 = arith.mulf %4, %3 : vector<16x128xf32>
    %c0_2 = arith.constant 0 : index
    %c0_3 = arith.constant 0 : index
    %6 = vector.load %arg5[%c0_2, %c0_3] : memref<16x128xf32, #tpu.memory_space<vmem>>, vector<16x128xf32>
    tpu.vector_store %arg5[%c0_2, %c0_3], %5 {strides = array<i32>} : memref<16x128xf32, #tpu.memory_space<vmem>>, vector<16x128xf32>,
    %c0_4 = arith.constant 0 : index
    %c0_5 = arith.constant 0 : index
    %7 = vector.load %arg2[%c0_4, %c0_5] : memref<128x128xf32, #tpu.memory_space<vmem>>, vector<128x128xf32>
    %cst = arith.constant dense<0.000000e+00> : vector<16x128xf32>
    %8 = tpu.matmul %3, %7, %cst {dimension_numbers = #tpu.dot_dimension_numbers<[1], [0], [0], [1], [0, 0, 1, 1], [], []>} : vector<16x128xf32>, vector<128x128xf32>, vector<16x128xf32> -> vector<16x128xf32>
    %c0_6 = arith.constant 0 : index
    %c0_7 = arith.constant 0 : index
    %9 = vector.load %arg5[%c0_6, %c0_7] : memref<16x128xf32, #tpu.memory_space<vmem>>, vector<16x128xf32>
    %10 = vector.broadcast %1 : f32 to vector<16x128xf32>
    %11 = arith.mulf %10, %8 : vector<16x128xf32>
    %12 = arith.addf %9, %11 : vector<16x128xf32>
    %c0_8 = arith.constant 0 : index
    %c0_9 = arith.constant 0 : index
    %13 = vector.load %arg5[%c0_8, %c0_9] : memref<16x128xf32, #tpu.memory_space<vmem>>, vector<16x128xf32>
    tpu.vector_store %arg5[%c0_8, %c0_9], %12 {strides = array<i32>} : memref<16x128xf32, #tpu.memory_space<vmem>>, vector<16x128xf32>,
    %cst_10 = arith.constant dense<0.000000e+00> : vector<16x128xf32>
    %14 = tpu.matmul %8, %7, %cst_10 {dimension_numbers = #tpu.dot_dimension_numbers<[1], [0], [0], [1], [0, 0, 1, 1], [], []>} : vector<16x128xf32>, vector<128x128xf32>, vector<16x128xf32> -> vector<16x128xf32>
    %c0_11 = arith.constant 0 : index
    %c0_12 = arith.constant 0 : index
    %15 = vector.load %arg5[%c0_11, %c0_12] : memref<16x128xf32, #tpu.memory_space<vmem>>, vector<16x128xf32>
    %16 = vector.broadcast %2 : f32 to vector<16x128xf32>
    %17 = arith.mulf %16, %14 : vector<16x128xf32>
    %18 = arith.addf %15, %17 : vector<16x128xf32>
    %c0_13 = arith.constant 0 : index
    %c0_14 = arith.constant 0 : index
    %19 = vector.load %arg5[%c0_13, %c0_14] : memref<16x128xf32, #tpu.memory_space<vmem>>, vector<16x128xf32>
    tpu.vector_store %arg5[%c0_13, %c0_14], %18 {strides = array<i32>} : memref<16x128xf32, #tpu.memory_space<vmem>>, vector<16x128xf32>,
    %c0_15 = arith.constant 0 : index
    %c0_16 = arith.constant 0 : index
    %20 = vector.load %arg5[%c0_15, %c0_16] : memref<16x128xf32, #tpu.memory_space<vmem>>, vector<16x128xf32>
    %cst_17 = arith.constant 0.000000e+00 : f32
    %21 = vector.broadcast %cst_17 : f32 to vector<16x128xf32>
    %22 = arith.maximumf %20, %21 : vector<16x128xf32>
    %c0_18 = arith.constant 0 : index
    %c0_19 = arith.constant 0 : index
    %23 = vector.load %arg4[%c0_18, %c0_19] : memref<16x128xf32, #tpu.memory_space<vmem>>, vector<16x128xf32>
    tpu.vector_store %arg4[%c0_18, %c0_19], %22 {strides = array<i32>} : memref<16x128xf32, #tpu.memory_space<vmem>>, vector<16x128xf32>,
    return
  }
  func.func @transform_0(%arg0: i32, %arg1: memref<3xf32, #tpu.memory_space<smem>>) -> (i32, i32) {
    %c0_i32 = arith.constant 0 : i32
    %c0_i32_0 = arith.constant 0 : i32
    %c0_i32_1 = arith.constant 0 : i32
    return %c0_i32, %c0_i32_0 : i32, i32
  }
  func.func @transform_1(%arg0: i32, %arg1: memref<3xf32, #tpu.memory_space<smem>>) -> (i32, i32) {
    %c0_i32 = arith.constant 0 : i32
    %c0_i32_0 = arith.constant 0 : i32
    return %arg0, %c0_i32 : i32, i32
  }
  func.func @transform_2(%arg0: i32, %arg1: memref<3xf32, #tpu.memory_space<smem>>) -> (i32, i32) {
    %c0_i32 = arith.constant 0 : i32
    %c0_i32_0 = arith.constant 0 : i32
    return %arg0, %c0_i32 : i32, i32
  }
}

</mosaic_0001>

<llo_original>
// kernel: tpu_custom_call.1
$region0: #{tpu_custom_call.1}
  #allocation0 [shape = 'u32[]', space=smem, size = 0x4, offset = 0x4, fixed_abs, tag = 'smem constant byte address 0x4 - core index']
  #allocation1 [shape = 'u32[72,128]{1,0:T(1,128)}', space=vmem, size = 0x9000, scoped, tag = 'internal scratch']
  #allocation2 [shape = 'f32[16,128]{1,0:T(8,128)}', space=vmem, size = 0x2000, scoped, tag = 'scratch operand']
  #allocation3 [shape = 's32[1]{0}', space=sflag, size = 0x4, scoped, tag = 'scoped memory for tpu_custom_call.1']
  #allocation4 [shape = 'u8[512]{0}', space=smem, size = 0x200, scoped, tag = 'prefetched SMEM operand 0']
  %s0 = inlined_call_operand.hbm [shape: f32[3], index: 0, kind: input, shape index: {}]
  %s1 = inlined_call_operand.hbm [shape: f32[128,128], index: 1, kind: input, shape index: {}]
  %s2 = inlined_call_operand.hbm [shape: f32[32,128], index: 2, kind: input, shape index: {}]
  %s3 = inlined_call_operand.hbm [shape: f32[32,128], index: 3, kind: output, shape index: {}]
  %s4 = sld [smem:[#allocation0]]
  $region49: #{tpu_custom_call.1} parent=0
    _
  %s6 = ssub.s32 1, %s4
  %s7 = scalar_select 0, %s6, %s4
  %s9 = sshll.u32 %s0, 4
  %s10 = int_to_ptr.hbm [resolvable:$true] %s9
  %12 = dma.hbm_to_smem %s10, 16, [#allocation4], [#allocation3]
  %14 = dma.done [#allocation3], 16
  %15 = sfence
  $region1: #{tpu_custom_call.1} parent=0
    #allocation5 [shape = 'u8[65536]{0}', space=vmem, size = 0x10000, scoped, tag = 'input window, operand 1, single buffered']
    #allocation6 [shape = 's32[2]{0}', space=sflag, size = 0x8, scoped, tag = 'scoped memory for tpu_custom_call.1']
    #allocation7 [shape = 's32[2]{0}', space=sflag, size = 0x8, scoped, tag = 'scoped memory for tpu_custom_call.1']
    #allocation8 [shape = 'u8[16384]{0}', space=vmem, size = 0x4000, scoped, tag = 'input window, operand 2']
    #allocation9 [shape = 's32[2]{0}', space=sflag, size = 0x8, scoped, tag = 'scoped memory for tpu_custom_call.1']
    #allocation10 [shape = 'u8[16384]{0}', space=vmem, size = 0x4000, scoped, tag = 'output window, operand 0']
    %16 = vsyncpa [#allocation6], 0
    %17 = vsyncpa [#allocation9], 0
    %s18 = scalar_lea.sflag [#allocation9], 1
    %19 = vsyncpa %s18, 0
    %20 = vsyncpa [#allocation7], 0
    %s21 = scalar_lea.sflag [#allocation7], 1
    %22 = vsyncpa %s21, 0
    loop: start=0, step=1, limit=4
    $region2: #{tpu_custom_call.1} parent=1 // loop_pre_header
      _
    $region3: #{tpu_custom_call.1} parent=1 // loop_header
      %s24 = sphi 0, %s28
      %p25 = scmp.ge.s32.totalorder %s24, 4
      %s32 = sphi 0, %s32
      %s34 = sphi 0, %s32
      %s35 = sphi 0, %s34
      %s49 = sphi 0, %s35
      %s55 = sphi 0, %s57
      %s58 = sphi 0, %s55
      %s59 = sphi 0, %s58
      %s75 = sphi 0, %s59
      %s81 = sphi 0, %s83
      %s84 = sphi 0, %s81
      %s85 = sphi 0, %s84
      %s101 = sphi 0, %s85
    $region4: #{tpu_custom_call.1} parent=1 // loop_header_branch
      %27 = sbr.rel (%p25) target = $region8
    $region5: #{tpu_custom_call.1} parent=1 // loop_body
      %s29 = ssub.s32 %s24, 1
      %s30 = ssub.s32 %s24, 2
      %s31 = sadd.s32 %s24, 1
      %s33 = sadd.s32 %s32, 1
      %p36 = scmp.eq.s32.totalorder %s24, 1
      %p37 = scmp.ne.s32.totalorder %s32, %s34
      %p38 = scmp.eq.s32.totalorder %s24, 0
      %p39 = por %p37, %p38
      %p40 = scmp.ne.s32.totalorder %s32, %s34
      %p41 = scmp.eq.s32.totalorder %s29, 1
      %p42 = por %p40, %p41
      %p43 = scmp.ne.s32.totalorder %s34, %s35
      %p44 = scmp.eq.s32.totalorder %s29, 0
      %p45 = por %p43, %p44
      %p46 = scmp.ne.s32.totalorder %s34, %s35
      %p47 = scmp.eq.s32.totalorder %s30, 1
      %p48 = por %p46, %p47
      %p50 = scmp.ne.s32.totalorder %s35, %s49
      %p51 = scmp.eq.s32.totalorder %s30, 0
      %p52 = por %p50, %p51
      %s53 = ssub.s32 %s24, %s31
      %p54 = scmp.eq.s32.totalorder %s53, 0
      %s56 = sadd.s32 %s55, 1
      %s57 = scalar_select %p54, %s55, %s56
      %p60 = pneg %p54
      %p61 = scmp.eq.s32.totalorder %s24, 1
      %p62 = por %p60, %p61
      %p63 = scmp.ne.s32.totalorder %s55, %s58
      %p64 = scmp.eq.s32.totalorder %s24, 0
      %p65 = por %p63, %p64
      %p66 = scmp.ne.s32.totalorder %s55, %s58
      %p67 = scmp.eq.s32.totalorder %s29, 1
      %p68 = por %p66, %p67
      %p69 = scmp.ne.s32.totalorder %s58, %s59
      %p70 = scmp.eq.s32.totalorder %s29, 0
      %p71 = por %p69, %p70
      %p72 = scmp.ne.s32.totalorder %s58, %s59
      %p73 = scmp.eq.s32.totalorder %s30, 1
      %p74 = por %p72, %p73
      %p76 = scmp.ne.s32.totalorder %s59, %s75
      %p77 = scmp.eq.s32.totalorder %s30, 0
      %p78 = por %p76, %p77
      %s79 = ssub.s32 %s24, %s31
      %p80 = scmp.eq.s32.totalorder %s79, 0
      %s82 = sadd.s32 %s81, 1
      %s83 = scalar_select %p80, %s81, %s82
      %p86 = pneg %p80
      %p87 = scmp.eq.s32.totalorder %s24, 1
      %p88 = por %p86, %p87
      %p89 = scmp.ne.s32.totalorder %s81, %s84
      %p90 = scmp.eq.s32.totalorder %s24, 0
      %p91 = por %p89, %p90
      %p92 = scmp.ne.s32.totalorder %s81, %s84
      %p93 = scmp.eq.s32.totalorder %s29, 1
      %p94 = por %p92, %p93
      %p95 = scmp.ne.s32.totalorder %s84, %s85
      %p96 = scmp.eq.s32.totalorder %s29, 0
      %p97 = por %p95, %p96
      %p98 = scmp.ne.s32.totalorder %s84, %s85
      %p99 = scmp.eq.s32.totalorder %s30, 1
      %p100 = por %p98, %p99
      %p102 = scmp.ne.s32.totalorder %s85, %s101
      %p103 = scmp.eq.s32.totalorder %s30, 0
      %p104 = por %p102, %p103
      %p105 = scmp.le.s32.totalorder 1, %s24
      %p106 = scmp.lt.s32.totalorder %s24, 3
      %p107 = pnand %p105, %p106
      %p108 = pneg %p107
      // Predicated region
      $region9: #{tpu_custom_call.1} parent=5 // pred_check
        _
      $region10: #{tpu_custom_call.1} parent=5 // pred_check_branch
        %110 = sbr.rel (%p107) target = $region12
      $region11: #{tpu_custom_call.1} parent=5 // pred_region
        %s111 = ssub.s32 %s24, 1
        // Predicated region
        $region13: #{tpu_custom_call.1} parent=11 // pred_check
          %p112 = pneg %p45
        $region14: #{tpu_custom_call.1} parent=11 // pred_check_branch
          %114 = sbr.rel (%p112) target = $region16
        $region15: #{tpu_custom_call.1} parent=11 // pred_region
          %116 = vsyncadd [#allocation6], 0
          %s117 = sshll.u32 %s1, 4
          %s118 = int_to_ptr.hbm [resolvable:$true] %s117
          %s119 = sshll.u32 [#allocation5], 4
          %s120 = int_to_ptr.vmem [resolvable:$true] %s119
          %125 = dma.hbm_to_vmem [thread:$0]  %s118, 2048, %s120, [#allocation6], 128, 128, 8
        $region16: #{tpu_custom_call.1} parent=11 // pred_fallthru
          _
      $region12: #{tpu_custom_call.1} parent=5 // pred_fallthru
        _
      %p126 = scmp.lt.s32.totalorder %s24, 2
      // Predicated region
      $region17: #{tpu_custom_call.1} parent=5 // pred_check
        %p127 = pneg %p126
      $region18: #{tpu_custom_call.1} parent=5 // pred_check_branch
        %129 = sbr.rel (%p127) target = $region20
      $region19: #{tpu_custom_call.1} parent=5 // pred_region
        // Predicated region
        $region21: #{tpu_custom_call.1} parent=19 // pred_check
          %p130 = pneg %p65
        $region22: #{tpu_custom_call.1} parent=19 // pred_check_branch
          %132 = sbr.rel (%p130) target = $region24
        $region23: #{tpu_custom_call.1} parent=19 // pred_region
          %s133 = sand.u32 %s55, 1
          %s134 = scalar_lea.sflag [#allocation9], %s133
          %s135 = sand.u32 %s55, 1
          %s136 = smul.addr %s135, 16
          %s137 = scalar_lea.vmem [#allocation8], %s136
          %s138 = smul.u32 2, %s24
          %140 = vsyncadd %s134, 0
          %s141 = smul.addr %s138, 8
          %s142 = scalar_lea.hbm %s2, %s141
          %s143 = sshll.u32 %s142, 4
          %s144 = int_to_ptr.hbm [resolvable:$true] %s143
          %s145 = sshll.u32 %s137, 4
          %s146 = int_to_ptr.vmem [resolvable:$true] %s145
          %151 = dma.hbm_to_vmem [thread:$0]  %s144, 256, %s146, %s134, 128, 128, 8
        $region24: #{tpu_custom_call.1} parent=19 // pred_fallthru
          _
      $region20: #{tpu_custom_call.1} parent=5 // pred_fallthru
        _
      %p152 = scmp.le.s32.totalorder 1, %s24
      %p153 = scmp.lt.s32.totalorder %s24, 3
      %p154 = pnand %p152, %p153
      %p155 = pneg %p154
      // Predicated region
      $region25: #{tpu_custom_call.1} parent=5 // pred_check
        _
      $region26: #{tpu_custom_call.1} parent=5 // pred_check_branch
        %157 = sbr.rel (%p154) target = $region28
      $region27: #{tpu_custom_call.1} parent=5 // pred_region
        %s158 = ssub.s32 %s24, 1
        // Predicated region
        $region29: #{tpu_custom_call.1} parent=27 // pred_check
          %p159 = pneg %p45
        $region30: #{tpu_custom_call.1} parent=27 // pred_check_branch
          %161 = sbr.rel (%p159) target = $region32
        $region31: #{tpu_custom_call.1} parent=27 // pred_region
          %163 = dma.done [#allocation6], 2048
        $region32: #{tpu_custom_call.1} parent=27 // pred_fallthru
          _
        %s164 = sand.u32 %s58, 1
        %s165 = scalar_lea.sflag [#allocation9], %s164
        %s166 = sand.u32 %s58, 1
        %s167 = smul.addr %s166, 16
        %s168 = scalar_lea.vmem [#allocation8], %s167
        // Predicated region
        $region33: #{tpu_custom_call.1} parent=27 // pred_check
          %p169 = pneg %p71
        $region34: #{tpu_custom_call.1} parent=27 // pred_check_branch
          %171 = sbr.rel (%p169) target = $region36
        $region35: #{tpu_custom_call.1} parent=27 // pred_region
          %173 = dma.done %s165, 256
        $region36: #{tpu_custom_call.1} parent=27 // pred_fallthru
          _
        %p174 = pneg %p45
        %p175 = pneg %p42
        %s176 = sand.u32 %s58, 1
        %s177 = scalar_lea.sflag [#allocation9], %s176
        %s178 = sand.u32 %s58, 1
        %s179 = smul.addr %s178, 16
        %s180 = scalar_lea.vmem [#allocation8], %s179
        %p181 = pneg %p71
        %p182 = pneg %p68
        %p183 = pneg %p97
        %p184 = pneg %p94
        %s185 = sand.u32 %s84, 1
        %s186 = scalar_lea.sflag [#allocation7], %s185
        %s187 = sand.u32 %s84, 1
        %s188 = smul.addr %s187, 16
        %s189 = scalar_lea.vmem [#allocation10], %s188
        %s190 = smul.u32 2, %s29
        %s191 = smul.u32 2, %s29
        %s192 = sld [smem:[#allocation4]]
        %s193 = sld [smem:[#allocation4 + $0x1]]
        %s194 = sld [smem:[#allocation4 + $0x2]]
        %v195 = vld [vmem:[%s168] sm:$0xff]
        %v196 = vld [vmem:[%s168 + $0x8] sm:$0xff]
        %v197 = vstv %s192
        %v198 = vmul.f32 %v197, %v195
        %v199 = vmul.f32 %v197, %v196
        %200 = vst [vmem:[#allocation2] sm:$0xff] %v198
        %201 = vst [vmem:[#allocation2 + $0x8] sm:$0xff] %v199
        %v202 = vld [vmem:[#allocation5] sm:$0xff]
        %v203 = vld [vmem:[#allocation5 + $0x8] sm:$0xff]
        %v204 = vld [vmem:[#allocation5 + $0x10] sm:$0xff]
        %v205 = vld [vmem:[#allocation5 + $0x18] sm:$0xff]
        %v206 = vld [vmem:[#allocation5 + $0x20] sm:$0xff]
        %v207 = vld [vmem:[#allocation5 + $0x28] sm:$0xff]
        %v208 = vld [vmem:[#allocation5 + $0x30] sm:$0xff]
        %v209 = vld [vmem:[#allocation5 + $0x38] sm:$0xff]
        %v210 = vld [vmem:[#allocation5 + $0x40] sm:$0xff]
        %v211 = vld [vmem:[#allocation5 + $0x48] sm:$0xff]
        %v212 = vld [vmem:[#allocation5 + $0x50] sm:$0xff]
        %v213 = vld [vmem:[#allocation5 + $0x58] sm:$0xff]
        %v214 = vld [vmem:[#allocation5 + $0x60] sm:$0xff]
        %v215 = vld [vmem:[#allocation5 + $0x68] sm:$0xff]
        %v216 = vld [vmem:[#allocation5 + $0x70] sm:$0xff]
        %v217 = vld [vmem:[#allocation5 + $0x78] sm:$0xff]
        %218 = vmatpush.msra.mxu0 %v217
        %219 = vmatpush.msra.mxu0 %v216
        %220 = vmatpush.msra.mxu0 %v215
        %221 = vmatpush.msra.mxu0 %v214
        %222 = vmatpush.msra.mxu0 %v213
        %223 = vmatpush.msra.mxu0 %v212
        %224 = vmatpush.msra.mxu0 %v211
        %225 = vmatpush.msra.mxu0 %v210
        %226 = vmatpush.msra.mxu0 %v209
        %227 = vmatpush.msra.mxu0 %v208
        %228 = vmatpush.msra.mxu0 %v207
        %229 = vmatpush.msra.mxu0 %v206
        %230 = vmatpush.msra.mxu0 %v205
        %231 = vmatpush.msra.mxu0 %v204
        %232 = vmatpush.msra.mxu0 %v203
        %233 = vmatpush.msra.mxu0 %v202
        %234 = vmatmul.f32.gmra.mxu0 %v195
        %v235 = vpop.f32.mrf.mxu0
        %v236 = vadd.f32 0.0, %v235
        %237 = vmatmul.f32.gmra.mxu0 %v196
        %v238 = vpop.f32.mrf.mxu0
        %v239 = vadd.f32 0.0, %v238
        %240 = vdwg.mxu0
        %v241 = vld [vmem:[#allocation2] sm:$0xff]
        %v242 = vld [vmem:[#allocation2 + $0x8] sm:$0xff]
        %v243 = vstv %s193
        %v244 = vmul.f32 %v243, %v236
        %v245 = vmul.f32 %v243, %v239
        %v246 = vadd.f32 %v241, %v244
        %v247 = vadd.f32 %v242, %v245
        %248 = vst [vmem:[#allocation2] sm:$0xff] %v246
        %249 = vst [vmem:[#allocation2 + $0x8] sm:$0xff] %v247
        %250 = vmatpush.msra.mxu0 %v217
        %251 = vmatpush.msra.mxu0 %v216
        %252 = vmatpush.msra.mxu0 %v215
        %253 = vmatpush.msra.mxu0 %v214
        %254 = vmatpush.msra.mxu0 %v213
        %255 = vmatpush.msra.mxu0 %v212
        %256 = vmatpush.msra.mxu0 %v211
        %257 = vmatpush.msra.mxu0 %v210
        %258 = vmatpush.msra.mxu0 %v209
        %259 = vmatpush.msra.mxu0 %v208
        %260 = vmatpush.msra.mxu0 %v207
        %261 = vmatpush.msra.mxu0 %v206
        %262 = vmatpush.msra.mxu0 %v205
        %263 = vmatpush.msra.mxu0 %v204
        %264 = vmatpush.msra.mxu0 %v203
        %265 = vmatpush.msra.mxu0 %v202
        %266 = vmatmul.f32.gmra.mxu0 %v236
        %v267 = vpop.f32.mrf.mxu0
        %v268 = vadd.f32 0.0, %v267
        %269 = vmatmul.f32.gmra.mxu0 %v239
        %v270 = vpop.f32.mrf.mxu0
        %v271 = vadd.f32 0.0, %v270
        %272 = vdwg.mxu0
        %v273 = vld [vmem:[#allocation2] sm:$0xff]
        %v274 = vld [vmem:[#allocation2 + $0x8] sm:$0xff]
        %v275 = vstv %s194
        %v276 = vmul.f32 %v275, %v268
        %v277 = vmul.f32 %v275, %v271
        %v278 = vadd.f32 %v273, %v276
        %v279 = vadd.f32 %v274, %v277
        %280 = vst [vmem:[#allocation2] sm:$0xff] %v278
        %281 = vst [vmem:[#allocation2 + $0x8] sm:$0xff] %v279
        %v282 = vld [vmem:[#allocation2] sm:$0xff]
        %v283 = vld [vmem:[#allocation2 + $0x8] sm:$0xff]
        %v284 = vmax.f32 %v282, 0.0
        %v285 = vmax.f32 %v283, 0.0
        %286 = vst [vmem:[%s189] sm:$0xff] %v284
        %287 = vst [vmem:[%s189 + $0x8] sm:$0xff] %v285
        %s288 = sand.u32 %s84, 1
        %s289 = scalar_lea.sflag [#allocation7], %s288
        %s290 = sand.u32 %s84, 1
        %s291 = smul.addr %s290, 16
        %s292 = scalar_lea.vmem [#allocation10], %s291
        // Predicated region
        $region37: #{tpu_custom_call.1} parent=27 // pred_check
          %p293 = pneg %p94
        $region38: #{tpu_custom_call.1} parent=27 // pred_check_branch
          %295 = sbr.rel (%p293) target = $region40
        $region39: #{tpu_custom_call.1} parent=27 // pred_region
          %s296 = smul.u32 2, %s29
          %298 = vsyncadd %s289, 0
          %s299 = smul.addr %s296, 8
          %s300 = scalar_lea.hbm %s3, %s299
          %s301 = sshll.u32 %s292, 4
          %s302 = int_to_ptr.vmem [resolvable:$true] %s301
          %s303 = sshll.u32 %s300, 4
          %s304 = int_to_ptr.hbm [resolvable:$true] %s303
          %309 = dma.vmem_to_hbm [thread:$0]  %s302, 256, %s304, %s289, 128, 128, 8
        $region40: #{tpu_custom_call.1} parent=27 // pred_fallthru
          _
      $region28: #{tpu_custom_call.1} parent=5 // pred_fallthru
        _
      %p310 = scmp.le.s32.totalorder 2, %s24
      // Predicated region
      $region41: #{tpu_custom_call.1} parent=5 // pred_check
        %p311 = pneg %p310
      $region42: #{tpu_custom_call.1} parent=5 // pred_check_branch
        %313 = sbr.rel (%p311) target = $region44
      $region43: #{tpu_custom_call.1} parent=5 // pred_region
        %s314 = ssub.s32 %s24, 2
        // Predicated region
        $region45: #{tpu_custom_call.1} parent=43 // pred_check
          %p315 = pneg %p100
        $region46: #{tpu_custom_call.1} parent=43 // pred_check_branch
          %317 = sbr.rel (%p315) target = $region48
        $region47: #{tpu_custom_call.1} parent=43 // pred_region
          %s318 = sand.u32 %s85, 1
          %s319 = scalar_lea.sflag [#allocation7], %s318
          %s320 = sand.u32 %s85, 1
          %s321 = smul.addr %s320, 16
          %s322 = scalar_lea.vmem [#allocation10], %s321
          %324 = dma.done %s319, 256
        $region48: #{tpu_custom_call.1} parent=43 // pred_fallthru
          _
      $region44: #{tpu_custom_call.1} parent=5 // pred_fallthru
        _
    $region6: #{tpu_custom_call.1} parent=1 // loop_footer
      %s28 = sadd.s32 1, %s24
    $region7: #{tpu_custom_call.1} parent=1 // loop_footer_branch
      %23 = sbr.rel target = $region3
    $region8: #{tpu_custom_call.1} parent=1 // loop_exit
      _
    %325 = vsyncpa [#allocation6], 1
    %s326 = scalar_lea.sflag [#allocation6], 1
    %327 = vsyncpa %s326, 1
    %328 = vsyncpa [#allocation9], 1
    %s329 = scalar_lea.sflag [#allocation9], 1
    %330 = vsyncpa %s329, 1
    %331 = vsyncpa [#allocation7], 1
    %s332 = scalar_lea.sflag [#allocation7], 1
    %333 = vsyncpa %s332, 1

</llo_original>
